<compile_context>
chip_gen: v7x
topology: tpu7x:2x2x1
jax: 0.10.0
libtpu: 0.0.40
codegen_flags: <defaults>
</compile_context>

<pallas_src>
import jax
import jax.numpy as jnp
from jax.experimental import pallas as pl
from jax.experimental.pallas import tpu as pltpu  # noqa: F401  (TPU backend import)


def doubly_bubbly_kernel(x_ref, w1_ref, w2_ref, b_ref, out_ref):
    """Fused pi+vf 2-layer MLP: tanh(x @ W1_cat + b1) @ W2_blockdiag + b2."""
    two_h = w1_ref.shape[1]          # 2H (static)
    two_l = w2_ref.shape[1]          # 2L (static)

    x = x_ref[...]
    b1 = b_ref[:, :two_h]                       # (1, 2H) — tile-aligned static slice
    b2 = b_ref[:, two_h:two_h + two_l]          # (1, 2L)

    # Layer 1: one lane-dense (B, 2H) matmul + single tanh over both networks.
    h = jnp.tanh(
        jnp.dot(x, w1_ref[...], preferred_element_type=jnp.float32) + b1
    )

    # Layer 2: block-diagonal W2 keeps pi / vf independent; single 2L-wide store.
    out_ref[...] = (
        jnp.dot(h, w2_ref[...], preferred_element_type=jnp.float32) + b2
    ).astype(out_ref.dtype)


def prepare_params(pi_params, vf_params):
    """One-time packing of PyTorch-convention params into kernel layout.

    pi_params / vf_params: (W1 (H,F), b1 (H,), W2 (L,H), b2 (L,)) in
    nn.Linear (out, in) convention.
    Returns (w1_cat (F,2H), w2_blockdiag (2H,2L), bias_packed (1, 2H+2L)).
    """
    w1p, b1p, w2p, b2p = pi_params
    w1v, b1v, w2v, b2v = vf_params
    H = w1p.shape[0]
    L = w2p.shape[0]

    # y = x @ W.T + b  ->  store transposed (in, out) weights once.
    w1_cat = jnp.concatenate([w1p.T, w1v.T], axis=1)                # (F, 2H)

    w2_bd = jnp.zeros((2 * H, 2 * L), jnp.float32)
    w2_bd = w2_bd.at[:H, :L].set(w2p.T)                             # pi block
    w2_bd = w2_bd.at[H:, L:].set(w2v.T)                             # vf block
    # Off-diagonal blocks are exact zeros -> no pi/vf cross-contamination.

    bias_packed = jnp.concatenate([b1p, b1v, b2p, b2v]).reshape(1, 2 * H + 2 * L)
    return (w1_cat, w2_bd, bias_packed)


@jax.jit
def doubly_bubbly_forward(obs, packed_params):
    """Returns (pi_latent, vf_latent), mirroring DoublyBubbly.forward(obs)."""
    w1_cat, w2_bd, bias_packed = packed_params
    B, F = obs.shape
    two_h = w1_cat.shape[1]
    two_l = w2_bd.shape[1]
    L = two_l // 2

    itemsize = 4  # f32
    cost = pl.CostEstimate(
        flops=2 * B * (F * two_h + two_h * two_l),
        transcendentals=B * two_h,
        bytes_accessed=itemsize
        * (B * F + F * two_h + two_h * two_l + bias_packed.size + B * two_l),
    )

    def full_spec(a):
        return pl.BlockSpec(a.shape, lambda: (0,) * a.ndim)

    out = pl.pallas_call(
        doubly_bubbly_kernel,
        out_shape=jax.ShapeDtypeStruct((B, two_l), obs.dtype),
        in_specs=[full_spec(obs), full_spec(w1_cat), full_spec(w2_bd),
                  full_spec(bias_packed)],
        out_specs=pl.BlockSpec((B, two_l), lambda: (0, 0)),
        cost_estimate=cost,
    )(obs, w1_cat, w2_bd, bias_packed)

    # Static split of the fused (B, 2L) result into (pi, vf).
    return out[:, :L], out[:, L:]


def init_mlp_params(key, in_dim, hidden_dim, out_dim):
    """Deterministic init in nn.Linear convention: W (out, in), b (out,)."""
    k1, k2, k3, k4 = jax.random.split(key, 4)
    s1 = 1.0 / jnp.sqrt(in_dim)
    s2 = 1.0 / jnp.sqrt(hidden_dim)
    w1 = jax.random.uniform(k1, (hidden_dim, in_dim), jnp.float32, -s1, s1)
    b1 = jax.random.uniform(k2, (hidden_dim,), jnp.float32, -s1, s1)
    w2 = jax.random.uniform(k3, (out_dim, hidden_dim), jnp.float32, -s2, s2)
    b2 = jax.random.uniform(k4, (out_dim,), jnp.float32, -s2, s2)
    return (w1, b1, w2, b2)


def reference_forward(obs, pi_params, vf_params):
    def mlp(x, p):
        w1, b1, w2, b2 = p
        h = jnp.tanh(x @ w1.T + b1)
        return h @ w2.T + b2
    return mlp(obs, pi_params), mlp(obs, vf_params)


if __name__ == "__main__":
    key = jax.random.PRNGKey(0)
    k_obs, k_pi, k_vf = jax.random.split(key, 3)

    B, F, H, L = 8, 32, 64, 32     # batch, obs features, hidden, latent dims
    obs = jax.random.normal(k_obs, (B, F), jnp.float32)

    # Two independent copies of the same architecture (pi_network, vf_network).
    pi_params = init_mlp_params(k_pi, F, H, L)
    vf_params = init_mlp_params(k_vf, F, H, L)

    # One-time parameter packing (transposes, concat, block-diag).
    packed = prepare_params(pi_params, vf_params)
    packed = jax.block_until_ready(packed)

    pi_latent, vf_latent = doubly_bubbly_forward(obs, packed)
    jax.block_until_ready((pi_latent, vf_latent))

    # Sanity check vs pure-JAX reference of the PyTorch semantics.
    pi_ref, vf_ref = reference_forward(obs, pi_params, vf_params)
    assert jnp.allclose(pi_latent, pi_ref, atol=1e-5, rtol=1e-5)
    assert jnp.allclose(vf_latent, vf_ref, atol=1e-5, rtol=1e-5)
    assert pi_latent.shape == (B, L) and vf_latent.shape == (B, L)

    print("KERNEL_OK")
</pallas_src>

<mosaic_0001>
module attributes {stable_mosaic.version = 11 : i64} {
  func.func @doubly_bubbly_kernel(%arg0: memref<8x32xf32, #tpu.memory_space<vmem>>, %arg1: memref<32x128xf32, #tpu.memory_space<vmem>>, %arg2: memref<128x64xf32, #tpu.memory_space<vmem>>, %arg3: memref<1x192xf32, #tpu.memory_space<vmem>>, %arg4: memref<8x64xf32, #tpu.memory_space<vmem>>) attributes {dimension_semantics = [], scalar_prefetch = 0 : i64, scratch_operands = 0 : i64, tpu.core_type = #tpu.core_type<tc>} {
    %c0 = arith.constant 0 : index
    %c0_0 = arith.constant 0 : index
    %0 = vector.load %arg0[%c0, %c0_0] : memref<8x32xf32, #tpu.memory_space<vmem>>, vector<8x32xf32>
    %c0_1 = arith.constant 0 : index
    %c0_2 = arith.constant 0 : index
    %1 = vector.load %arg3[%c0_1, %c0_2] : memref<1x192xf32, #tpu.memory_space<vmem>>, vector<1x128xf32>
    %c0_3 = arith.constant 0 : index
    %c128 = arith.constant 128 : index
    %2 = vector.load %arg3[%c0_3, %c128] : memref<1x192xf32, #tpu.memory_space<vmem>>, vector<1x64xf32>
    %c0_4 = arith.constant 0 : index
    %c0_5 = arith.constant 0 : index
    %3 = vector.load %arg1[%c0_4, %c0_5] : memref<32x128xf32, #tpu.memory_space<vmem>>, vector<32x128xf32>
    %cst = arith.constant dense<0.000000e+00> : vector<8x128xf32>
    %4 = tpu.matmul %0, %3, %cst {dimension_numbers = #tpu.dot_dimension_numbers<[1], [0], [0], [1], [0, 0, 1, 1], [], []>} : vector<8x32xf32>, vector<32x128xf32>, vector<8x128xf32> -> vector<8x128xf32>
    %5 = vector.broadcast %1 : vector<1x128xf32> to vector<8x128xf32>
    %6 = arith.addf %4, %5 : vector<8x128xf32>
    %7 = math.tanh %6 : vector<8x128xf32>
    %c0_6 = arith.constant 0 : index
    %c0_7 = arith.constant 0 : index
    %8 = vector.load %arg2[%c0_6, %c0_7] : memref<128x64xf32, #tpu.memory_space<vmem>>, vector<128x64xf32>
    %cst_8 = arith.constant dense<0.000000e+00> : vector<8x64xf32>
    %9 = tpu.matmul %7, %8, %cst_8 {dimension_numbers = #tpu.dot_dimension_numbers<[1], [0], [0], [1], [0, 0, 1, 1], [], []>} : vector<8x128xf32>, vector<128x64xf32>, vector<8x64xf32> -> vector<8x64xf32>
    %10 = vector.broadcast %2 : vector<1x64xf32> to vector<8x64xf32>
    %11 = arith.addf %9, %10 : vector<8x64xf32>
    %c0_9 = arith.constant 0 : index
    %c0_10 = arith.constant 0 : index
    %12 = vector.load %arg4[%c0_9, %c0_10] : memref<8x64xf32, #tpu.memory_space<vmem>>, vector<8x64xf32>
    tpu.vector_store %arg4[%c0_9, %c0_10], %11 {strides = array<i32>} : memref<8x64xf32, #tpu.memory_space<vmem>>, vector<8x64xf32>,
    return
  }
}

</mosaic_0001>

<llo_original>
// kernel: doubly_bubbly_forward.1
$region0: #{doubly_bubbly_forward.1}
  #allocation0 [shape = 'u32[]', space=smem, size = 0x4, offset = 0x4, fixed_abs, tag = 'smem constant byte address 0x4 - core index']
  #allocation1 [shape = 'u32[144,128]{1,0:T(1,128)}', space=vmem, size = 0x12000, scoped, tag = 'internal scratch']
  %s0 = inlined_call_operand.vmem [shape: f32[8,32], index: 0, kind: input, shape index: {}]
  %s1 = inlined_call_operand.vmem [shape: f32[32,128], index: 1, kind: input, shape index: {}]
  %s2 = inlined_call_operand.vmem [shape: f32[128,64], index: 2, kind: input, shape index: {}]
  %s3 = inlined_call_operand.vmem [shape: f32[1,192], index: 3, kind: input, shape index: {}]
  %s4 = inlined_call_operand.vmem [shape: f32[8,64], index: 4, kind: output, shape index: {}]
  %s5 = sld [smem:[#allocation0]]
  $region26: #{doubly_bubbly_forward.1} parent=0
    _
  %s7 = ssub.s32 1, %s5
  %s8 = scalar_select 0, %s7, %s5
  // Predicated region
  $region2: #{doubly_bubbly_forward.1} parent=0 // pred_check
    _
  $region3: #{doubly_bubbly_forward.1} parent=0 // pred_check_branch
    %10 = sbr.rel (0) target = $region5
  $region4: #{doubly_bubbly_forward.1} parent=0 // pred_region
    _
  $region5: #{doubly_bubbly_forward.1} parent=0 // pred_fallthru
    _
  // Predicated region
  $region6: #{doubly_bubbly_forward.1} parent=0 // pred_check
    _
  $region7: #{doubly_bubbly_forward.1} parent=0 // pred_check_branch
    %12 = sbr.rel (0) target = $region9
  $region8: #{doubly_bubbly_forward.1} parent=0 // pred_region
    _
  $region9: #{doubly_bubbly_forward.1} parent=0 // pred_fallthru
    _
  // Predicated region
  $region10: #{doubly_bubbly_forward.1} parent=0 // pred_check
    _
  $region11: #{doubly_bubbly_forward.1} parent=0 // pred_check_branch
    %14 = sbr.rel (0) target = $region13
  $region12: #{doubly_bubbly_forward.1} parent=0 // pred_region
    _
  $region13: #{doubly_bubbly_forward.1} parent=0 // pred_fallthru
    _
  // Predicated region
  $region14: #{doubly_bubbly_forward.1} parent=0 // pred_check
    _
  $region15: #{doubly_bubbly_forward.1} parent=0 // pred_check_branch
    %16 = sbr.rel (0) target = $region17
  $region16: #{doubly_bubbly_forward.1} parent=0 // pred_region
    _
  $region17: #{doubly_bubbly_forward.1} parent=0 // pred_fallthru
    _
  %v17 = vld [vmem:[%s0] sm:$0xff]
  %v18 = vld [vmem:[%s3] sm:$0x1]
  %v19 = vld [vmem:[%s3 + $0x1] sm:$0x1]
  %v20 = vld [vmem:[%s1] sm:$0xff]
  %v21 = vld [vmem:[%s1 + $0x8] sm:$0xff]
  %v22 = vld [vmem:[%s1 + $0x10] sm:$0xff]
  %v23 = vld [vmem:[%s1 + $0x18] sm:$0xff]
  %v25 = vlaneseq
  %v26 = vshrl.u32 %v25, 7
  %v27 = vsub.s32 0, %v26
  %v28 = vrot.slane %v18, %v27
  %vm30 = vcmask 261120
  %v32 = vsel %vm30, %v17, 0
  %34 = vmatprep.subr.mxu0 0.0
  %35 = vmatpush1.msra.mxu0 %v20
  %36 = vmatprep.subr.mxu0 0.0
  %37 = vmatpush1.msra.mxu0 %v21
  %38 = vmatprep.subr.mxu0 0.0
  %39 = vmatpush1.msra.mxu0 %v22
  %40 = vmatprep.subr.mxu0 0.0
  %41 = vmatpush1.msra.mxu0 %v23
  %42 = vmatprep.subr.mxu0 0.0
  %43 = vmatpush1.msra.mxu0 0.0
  %44 = vmatprep.subr.mxu0 0.0
  %45 = vmatpush1.msra.mxu0 0.0
  %46 = vmatprep.subr.mxu0 0.0
  %47 = vmatpush1.msra.mxu0 0.0
  %48 = vmatprep.subr.mxu0 0.0
  %49 = vmatpush1.msra.mxu0 0.0
  %50 = vmatprep.subr.mxu0 0.0
  %51 = vmatpush1.msra.mxu0 0.0
  %52 = vmatprep.subr.mxu0 0.0
  %53 = vmatpush1.msra.mxu0 0.0
  %54 = vmatprep.subr.mxu0 0.0
  %55 = vmatpush1.msra.mxu0 0.0
  %56 = vmatprep.subr.mxu0 0.0
  %57 = vmatpush1.msra.mxu0 0.0
  %58 = vmatprep.subr.mxu0 0.0
  %59 = vmatpush1.msra.mxu0 0.0
  %60 = vmatprep.subr.mxu0 0.0
  %61 = vmatpush1.msra.mxu0 0.0
  %62 = vmatprep.subr.mxu0 0.0
  %63 = vmatpush1.msra.mxu0 0.0
  %64 = vmatprep.subr.mxu0 0.0
  %65 = vmatpush1.msra.mxu0 0.0
  %66 = vmatprep.subr.mxu0 0.0
  %67 = vmatpush1.msra.mxu0 0.0
  %68 = vmatprep.subr.mxu0 0.0
  %69 = vmatpush1.msra.mxu0 0.0
  %70 = vmatprep.subr.mxu0 0.0
  %71 = vmatpush1.msra.mxu0 0.0
  %72 = vmatprep.subr.mxu0 0.0
  %73 = vmatpush1.msra.mxu0 0.0
  %74 = vmatprep.subr.mxu0 0.0
  %75 = vmatpush1.msra.mxu0 0.0
  %76 = vmatprep.subr.mxu0 0.0
  %77 = vmatpush1.msra.mxu0 0.0
  %78 = vmatprep.subr.mxu0 0.0
  %79 = vmatpush1.msra.mxu0 0.0
  %80 = vmatprep.subr.mxu0 0.0
  %81 = vmatpush1.msra.mxu0 0.0
  %82 = vmatprep.subr.mxu0 0.0
  %83 = vmatpush1.msra.mxu0 0.0
  %84 = vmatprep.subr.mxu0 0.0
  %85 = vmatpush1.msra.mxu0 0.0
  %86 = vmatprep.subr.mxu0 0.0
  %87 = vmatpush1.msra.mxu0 0.0
  %88 = vmatprep.subr.mxu0 0.0
  %89 = vmatpush1.msra.mxu0 0.0
  %90 = vmatprep.subr.mxu0 0.0
  %91 = vmatpush1.msra.mxu0 0.0
  %92 = vmatprep.subr.mxu0 0.0
  %93 = vmatpush1.msra.mxu0 0.0
  %94 = vmatprep.subr.mxu0 0.0
  %95 = vmatpush1.msra.mxu0 0.0
  %96 = vmatprep.subr.mxu0 0.0
  %97 = vmatpush1.msra.mxu0 0.0
  %98 = vmatprep.mubr.f32.mxu0 0.0
  %99 = vmatmul.mubr.f32.gmra.mrb[0].mxu0 %v32
  %v100 = vpop.f32.mrb[0].mxu0
  %v101 = vadd.f32 %v28, %v100
  %v102 = vpop.f32.mrb[0].mxu0
  %103 = vdwg.mxu0
  %v104 = vtanh.pop %v101
  %v105 = vld [vmem:[%s2] sm:$0xff]
  %v106 = vld [vmem:[%s2 + $0x8] sm:$0xff]
  %v107 = vld [vmem:[%s2 + $0x10] sm:$0xff]
  %v108 = vld [vmem:[%s2 + $0x18] sm:$0xff]
  %v109 = vld [vmem:[%s2 + $0x20] sm:$0xff]
  %v110 = vld [vmem:[%s2 + $0x28] sm:$0xff]
  %v111 = vld [vmem:[%s2 + $0x30] sm:$0xff]
  %v112 = vld [vmem:[%s2 + $0x38] sm:$0xff]
  %v113 = vld [vmem:[%s2 + $0x40] sm:$0xff]
  %v114 = vld [vmem:[%s2 + $0x48] sm:$0xff]
  %v115 = vld [vmem:[%s2 + $0x50] sm:$0xff]
  %v116 = vld [vmem:[%s2 + $0x58] sm:$0xff]
  %v117 = vld [vmem:[%s2 + $0x60] sm:$0xff]
  %v118 = vld [vmem:[%s2 + $0x68] sm:$0xff]
  %v119 = vld [vmem:[%s2 + $0x70] sm:$0xff]
  %v120 = vld [vmem:[%s2 + $0x78] sm:$0xff]
  %v122 = vlaneseq
  %v123 = vshrl.u32 %v122, 7
  %v124 = vsub.s32 0, %v123
  %v125 = vrot.slane %v19, %v124
  %127 = vmatprep.subr.mxu0 0.0
  %128 = vmatpush1.msra.mxu0 %v105
  %129 = vmatprep.subr.mxu0 0.0
  %130 = vmatpush1.msra.mxu0 %v106
  %131 = vmatprep.subr.mxu0 0.0
  %132 = vmatpush1.msra.mxu0 %v107
  %133 = vmatprep.subr.mxu0 0.0
  %134 = vmatpush1.msra.mxu0 %v108
  %135 = vmatprep.subr.mxu0 0.0
  %136 = vmatpush1.msra.mxu0 %v109
  %137 = vmatprep.subr.mxu0 0.0
  %138 = vmatpush1.msra.mxu0 %v110
  %139 = vmatprep.subr.mxu0 0.0
  %140 = vmatpush1.msra.mxu0 %v111
  %141 = vmatprep.subr.mxu0 0.0
  %142 = vmatpush1.msra.mxu0 %v112
  %143 = vmatprep.subr.mxu0 0.0
  %144 = vmatpush1.msra.mxu0 %v113
  %145 = vmatprep.subr.mxu0 0.0
  %146 = vmatpush1.msra.mxu0 %v114
  %147 = vmatprep.subr.mxu0 0.0
  %148 = vmatpush1.msra.mxu0 %v115
  %149 = vmatprep.subr.mxu0 0.0
  %150 = vmatpush1.msra.mxu0 %v116
  %151 = vmatprep.subr.mxu0 0.0
  %152 = vmatpush1.msra.mxu0 %v117
  %153 = vmatprep.subr.mxu0 0.0
  %154 = vmatpush1.msra.mxu0 %v118
  %155 = vmatprep.subr.mxu0 0.0
  %156 = vmatpush1.msra.mxu0 %v119
  %157 = vmatprep.subr.mxu0 0.0
  %158 = vmatpush1.msra.mxu0 %v120
  %159 = vmatprep.subr.mxu0 0.0
  %160 = vmatpush1.msra.mxu0 0.0
  %161 = vmatprep.subr.mxu0 0.0
  %162 = vmatpush1.msra.mxu0 0.0
  %163 = vmatprep.subr.mxu0 0.0
  %164 = vmatpush1.msra.mxu0 0.0
  %165 = vmatprep.subr.mxu0 0.0
  %166 = vmatpush1.msra.mxu0 0.0
  %167 = vmatprep.subr.mxu0 0.0
  %168 = vmatpush1.msra.mxu0 0.0
  %169 = vmatprep.subr.mxu0 0.0
  %170 = vmatpush1.msra.mxu0 0.0
  %171 = vmatprep.subr.mxu0 0.0
  %172 = vmatpush1.msra.mxu0 0.0
  %173 = vmatprep.subr.mxu0 0.0
  %174 = vmatpush1.msra.mxu0 0.0
  %175 = vmatprep.subr.mxu0 0.0
  %176 = vmatpush1.msra.mxu0 0.0
  %177 = vmatprep.subr.mxu0 0.0
  %178 = vmatpush1.msra.mxu0 0.0
  %179 = vmatprep.subr.mxu0 0.0
  %180 = vmatpush1.msra.mxu0 0.0
  %181 = vmatprep.subr.mxu0 0.0
  %182 = vmatpush1.msra.mxu0 0.0
  %183 = vmatprep.subr.mxu0 0.0
  %184 = vmatpush1.msra.mxu0 0.0
  %185 = vmatprep.subr.mxu0 0.0
  %186 = vmatpush1.msra.mxu0 0.0
  %187 = vmatprep.subr.mxu0 0.0
  %188 = vmatpush1.msra.mxu0 0.0
  %189 = vmatprep.subr.mxu0 0.0
  %190 = vmatpush1.msra.mxu0 0.0
  %191 = vmatprep.mubr.f32.mxu0 0.0
  %192 = vmatmul.mubr.f32.gmra.mrb[0].mxu0 %v104
  %v193 = vpop.f32.mrb[0].mxu0
  %v194 = vadd.f32 %v125, %v193
  %v195 = vpop.f32.mrb[0].mxu0
  %196 = vdwg.mxu0
  %vm197 = vcmask 523264
  %198 = vst.msk [vmem:[%s4] sm:$0xff] %vm197, %v194
  // Predicated region
  $region18: #{doubly_bubbly_forward.1} parent=0 // pred_check
    _
  $region19: #{doubly_bubbly_forward.1} parent=0 // pred_check_branch
    %200 = sbr.rel (0) target = $region21
  $region20: #{doubly_bubbly_forward.1} parent=0 // pred_region
    _
  $region21: #{doubly_bubbly_forward.1} parent=0 // pred_fallthru
    _
  // Predicated region
  $region22: #{doubly_bubbly_forward.1} parent=0 // pred_check
    _
  $region23: #{doubly_bubbly_forward.1} parent=0 // pred_check_branch
    %202 = sbr.rel (0) target = $region25
  $region24: #{doubly_bubbly_forward.1} parent=0 // pred_region
    _
  $region25: #{doubly_bubbly_forward.1} parent=0 // pred_fallthru
    _

</llo_original>
